<compile_context>
chip_gen: v5e
topology: v5e:2x2
jax: 0.10.0
libtpu: 0.0.40
codegen_flags: <defaults>
</compile_context>

<pallas_src>
import jax
import jax.numpy as jnp
from jax.experimental import pallas as pl
from jax.experimental.pallas import tpu as pltpu

IN_FEATURES = 32
OUT_FEATURES = 8
HID1 = 60
HID2 = 30
LANES = 128  # TPU lane width; everything is padded to this


def _round_up(n, m):
    return ((n + m - 1) // m) * m


def pack_params(w1, b1, w2, b2, w3, b3):
    """Pack all parameters into one zero-padded (rows, 128) f32 slab.

    Row layout (all offsets are multiples of 8 sublanes):
      [0        : in_f )      W1  (in_f, 60)  in lanes 0:60
      [r1       : r1+128)     W2  (60, 30)    rows 0:60 of block, lanes 0:30
      [r1+128   : r1+256)     W3  (30, out)   rows 0:30 of block, lanes 0:out
      [r1+256   : r1+264)     biases: +0 -> b1, +1 -> b2, +2 -> b3
    Zero padding keeps padded lanes/rows mathematically inert, so the kernel
    runs full 128-lane matmuls with no masking.
    """
    in_f, h1 = w1.shape
    h2 = w2.shape[1]
    out_f = w3.shape[1]
    r1 = _round_up(in_f, 8)
    w2_off = r1
    w3_off = r1 + LANES
    b_off = r1 + 2 * LANES
    total = b_off + 8

    slab = jnp.zeros((total, LANES), jnp.float32)
    slab = slab.at[0:in_f, 0:h1].set(w1)
    slab = slab.at[w2_off:w2_off + w2.shape[0], 0:h2].set(w2)
    slab = slab.at[w3_off:w3_off + w3.shape[0], 0:out_f].set(w3)
    slab = slab.at[b_off + 0, 0:h1].set(jnp.asarray(b1).reshape(-1))
    slab = slab.at[b_off + 1, 0:h2].set(jnp.asarray(b2).reshape(-1))
    slab = slab.at[b_off + 2, 0:out_f].set(jnp.asarray(b3).reshape(-1))
    return slab


def _make_kernel(in_f, out_f, w2_off, w3_off, b_off):
    d_soft = out_f - 1  # columns that go through the custom softmax

    def kernel(x_ref, p_ref, out_ref):
        x = x_ref[...]                                        # (B, in_f)

        # ---- lin1 + ReLU (padded lanes 60..127 stay exactly 0) ----
        w1 = p_ref[0:in_f, :]                                 # (in_f, 128)
        b1 = p_ref[b_off:b_off + 1, :]                        # (1, 128)
        h1 = jnp.maximum(
            jnp.dot(x, w1, preferred_element_type=jnp.float32) + b1, 0.0)

        # ---- lin2 + ReLU (padded rows of W2 are 0 -> no masking needed) ----
        w2 = p_ref[w2_off:w2_off + LANES, :]                  # (128, 128)
        b2 = p_ref[b_off + 1:b_off + 2, :]
        h2 = jnp.maximum(
            jnp.dot(h1, w2, preferred_element_type=jnp.float32) + b2, 0.0)

        # ---- lin3 logits (lanes out_f..127 are exactly 0) ----
        w3 = p_ref[w3_off:w3_off + LANES, :]                  # (128, 128)
        b3 = p_ref[b_off + 2:b_off + 3, :]
        y = jnp.dot(h2, w3, preferred_element_type=jnp.float32) + b3  # (B, 128)

        # ---- fused heads: one lane-dense (B, 128) store ----
        col = jax.lax.broadcasted_iota(jnp.int32, y.shape, 1)
        soft_mask = col < d_soft              # columns 0 .. out_f-2
        last_mask = col == d_soft             # column out_f-1

        e = jnp.exp(y * 1e-6)                                  # EUP
        # GLOBAL sum over the softmax columns only (matches torch.sum over the
        # whole (B, out_f-1) tensor).
        s = jnp.sum(jnp.where(soft_mask, e, 0.0), keepdims=True)   # (1, 1)
        inv = pl.reciprocal(s, approx=False)                       # exact, EUP
        out_ref[...] = jnp.where(
            soft_mask, e * inv,
            jnp.where(last_mask, jnp.maximum(y, 0.0), 0.0))

    return kernel


def model1_forward(x, packed_params, out_features=OUT_FEATURES):
    """Runs the fused kernel; returns (x1, x2) exactly like Model1.forward."""
    B, in_f = x.shape
    r1 = _round_up(in_f, 8)
    w2_off = r1
    w3_off = r1 + LANES
    b_off = r1 + 2 * LANES

    kernel = _make_kernel(in_f, out_features, w2_off, w3_off, b_off)
    vmem = pl.BlockSpec(memory_space=pltpu.MemorySpace.VMEM)
    out = pl.pallas_call(
        kernel,
        out_shape=jax.ShapeDtypeStruct((B, LANES), jnp.float32),
        in_specs=[vmem, vmem],
        out_specs=vmem,
    )(x, packed_params)

    # Cheap XLA slices of the single lane-dense kernel output.
    x1 = out[:, : out_features - 1]
    x2 = out[:, out_features - 1 : out_features]
    return x1, x2


def init_params(key):
    """Deterministic init mimicking nn.Linear's uniform(-1/sqrt(fan_in), ...)."""
    ks = jax.random.split(key, 6)

    def lin(kw, kb, fan_in, fan_out):
        bound = 1.0 / jnp.sqrt(fan_in)
        w = jax.random.uniform(kw, (fan_in, fan_out), jnp.float32, -bound, bound)
        b = jax.random.uniform(kb, (1, fan_out), jnp.float32, -bound, bound)
        return w, b

    w1, b1 = lin(ks[0], ks[1], IN_FEATURES, HID1)
    w2, b2 = lin(ks[2], ks[3], HID1, HID2)
    w3, b3 = lin(ks[4], ks[5], HID2, OUT_FEATURES)
    return w1, b1, w2, b2, w3, b3


def reference_forward(x, w1, b1, w2, b2, w3, b3):
    h1 = jnp.maximum(x @ w1 + b1, 0.0)
    h2 = jnp.maximum(h1 @ w2 + b2, 0.0)
    y = h2 @ w3 + b3
    y1 = y[:, : OUT_FEATURES - 1]
    e = jnp.exp(y1 / 1000000.0)
    x1 = e / jnp.sum(e)
    x2 = jnp.maximum(y[:, OUT_FEATURES - 1 : OUT_FEATURES], 0.0)
    return x1, x2


if __name__ == "__main__":
    key = jax.random.PRNGKey(0)
    kx, kp = jax.random.split(key)

    batch = 8
    x = jax.random.normal(kx, (batch, IN_FEATURES), jnp.float32)
    params = init_params(kp)

    packed = pack_params(*params)          # one-time parameter packing
    x1, x2 = model1_forward(x, packed)
    jax.block_until_ready((x1, x2))

    # correctness check vs. plain-JAX reference
    r1, r2 = reference_forward(x, *params)
    assert x1.shape == (batch, OUT_FEATURES - 1)
    assert x2.shape == (batch, 1)
    assert jnp.allclose(x1, r1, atol=1e-5, rtol=1e-5)
    assert jnp.allclose(x2, r2, atol=1e-5, rtol=1e-5)

    print("KERNEL_OK")
</pallas_src>

<mosaic_0001>
module attributes {stable_mosaic.version = 11 : i64} {
  func.func @kernel(%arg0: memref<8x32xf32, #tpu.memory_space<vmem>>, %arg1: memref<296x128xf32, #tpu.memory_space<vmem>>, %arg2: memref<8x128xf32, #tpu.memory_space<vmem>>) attributes {dimension_semantics = [], scalar_prefetch = 0 : i64, scratch_operands = 0 : i64, tpu.core_type = #tpu.core_type<tc>} {
    %c0 = arith.constant 0 : index
    %c0_0 = arith.constant 0 : index
    %0 = vector.load %arg0[%c0, %c0_0] : memref<8x32xf32, #tpu.memory_space<vmem>>, vector<8x32xf32>
    %c0_1 = arith.constant 0 : index
    %c0_2 = arith.constant 0 : index
    %1 = vector.load %arg1[%c0_1, %c0_2] : memref<296x128xf32, #tpu.memory_space<vmem>>, vector<32x128xf32>
    %c288 = arith.constant 288 : index
    %c0_3 = arith.constant 0 : index
    %2 = vector.load %arg1[%c288, %c0_3] : memref<296x128xf32, #tpu.memory_space<vmem>>, vector<1x128xf32>
    %cst = arith.constant dense<0.000000e+00> : vector<8x128xf32>
    %3 = tpu.matmul %0, %1, %cst {dimension_numbers = #tpu.dot_dimension_numbers<[1], [0], [0], [1], [0, 0, 1, 1], [], []>} : vector<8x32xf32>, vector<32x128xf32>, vector<8x128xf32> -> vector<8x128xf32>
    %4 = vector.broadcast %2 : vector<1x128xf32> to vector<8x128xf32>
    %5 = arith.addf %3, %4 : vector<8x128xf32>
    %cst_4 = arith.constant 0.000000e+00 : f32
    %6 = vector.broadcast %cst_4 : f32 to vector<8x128xf32>
    %7 = arith.maximumf %5, %6 : vector<8x128xf32>
    %c32 = arith.constant 32 : index
    %c0_5 = arith.constant 0 : index
    %8 = vector.load %arg1[%c32, %c0_5] : memref<296x128xf32, #tpu.memory_space<vmem>>, vector<128x128xf32>
    %c289 = arith.constant 289 : index
    %c0_6 = arith.constant 0 : index
    %9 = vector.load %arg1[%c289, %c0_6] : memref<296x128xf32, #tpu.memory_space<vmem>>, vector<1x128xf32>
    %cst_7 = arith.constant dense<0.000000e+00> : vector<8x128xf32>
    %10 = tpu.matmul %7, %8, %cst_7 {dimension_numbers = #tpu.dot_dimension_numbers<[1], [0], [0], [1], [0, 0, 1, 1], [], []>} : vector<8x128xf32>, vector<128x128xf32>, vector<8x128xf32> -> vector<8x128xf32>
    %11 = vector.broadcast %9 : vector<1x128xf32> to vector<8x128xf32>
    %12 = arith.addf %10, %11 : vector<8x128xf32>
    %cst_8 = arith.constant 0.000000e+00 : f32
    %13 = vector.broadcast %cst_8 : f32 to vector<8x128xf32>
    %14 = arith.maximumf %12, %13 : vector<8x128xf32>
    %c160 = arith.constant 160 : index
    %c0_9 = arith.constant 0 : index
    %15 = vector.load %arg1[%c160, %c0_9] : memref<296x128xf32, #tpu.memory_space<vmem>>, vector<128x128xf32>
    %c290 = arith.constant 290 : index
    %c0_10 = arith.constant 0 : index
    %16 = vector.load %arg1[%c290, %c0_10] : memref<296x128xf32, #tpu.memory_space<vmem>>, vector<1x128xf32>
    %cst_11 = arith.constant dense<0.000000e+00> : vector<8x128xf32>
    %17 = tpu.matmul %14, %15, %cst_11 {dimension_numbers = #tpu.dot_dimension_numbers<[1], [0], [0], [1], [0, 0, 1, 1], [], []>} : vector<8x128xf32>, vector<128x128xf32>, vector<8x128xf32> -> vector<8x128xf32>
    %18 = vector.broadcast %16 : vector<1x128xf32> to vector<8x128xf32>
    %19 = arith.addf %17, %18 : vector<8x128xf32>
    %20 = tpu.iota {dimensions = array<i32: 1>} : vector<8x128xi32>
    %c7_i32 = arith.constant 7 : i32
    %21 = vector.broadcast %c7_i32 : i32 to vector<8x128xi32>
    %22 = arith.cmpi slt, %20, %21 : vector<8x128xi32>
    %c7_i32_12 = arith.constant 7 : i32
    %23 = vector.broadcast %c7_i32_12 : i32 to vector<8x128xi32>
    %24 = arith.cmpi eq, %20, %23 : vector<8x128xi32>
    %cst_13 = arith.constant 9.99999997E-7 : f32
    %25 = vector.broadcast %cst_13 : f32 to vector<8x128xf32>
    %26 = arith.mulf %19, %25 : vector<8x128xf32>
    %27 = math.exp %26 : vector<8x128xf32>
    %cst_14 = arith.constant 0.000000e+00 : f32
    %28 = vector.broadcast %cst_14 : f32 to vector<8x128xf32>
    %29 = arith.select %22, %27, %28 : vector<8x128xi1>, vector<8x128xf32>
    %30 = vector.shape_cast %29 : vector<8x128xf32> to vector<1x8x128xf32>
    %cst_15 = arith.constant dense<0.000000e+00> : vector<1xf32>
    %31 = vector.multi_reduction <add>, %30, %cst_15 [1, 2] : vector<1x8x128xf32> to vector<1xf32>
    %32 = vector.shape_cast %31 : vector<1xf32> to vector<1x1x1xf32>
    %33 = vector.extract %32[0, 0, 0] : f32 from vector<1x1x1xf32>
    %34 = vector.broadcast %33 : f32 to vector<1x1xf32>
    %35 = tpu.reciprocal %34 : vector<1x1xf32> -> vector<1x1xf32>
    %36 = vector.broadcast %35 : vector<1x1xf32> to vector<8x128xf32>
    %37 = arith.mulf %27, %36 : vector<8x128xf32>
    %cst_16 = arith.constant 0.000000e+00 : f32
    %38 = vector.broadcast %cst_16 : f32 to vector<8x128xf32>
    %39 = arith.maximumf %19, %38 : vector<8x128xf32>
    %cst_17 = arith.constant 0.000000e+00 : f32
    %40 = vector.broadcast %cst_17 : f32 to vector<8x128xf32>
    %41 = arith.select %24, %39, %40 : vector<8x128xi1>, vector<8x128xf32>
    %42 = arith.select %22, %37, %41 : vector<8x128xi1>, vector<8x128xf32>
    %c0_18 = arith.constant 0 : index
    %c0_19 = arith.constant 0 : index
    %43 = vector.load %arg2[%c0_18, %c0_19] : memref<8x128xf32, #tpu.memory_space<vmem>>, vector<8x128xf32>
    tpu.vector_store %arg2[%c0_18, %c0_19], %42 {strides = array<i32>} : memref<8x128xf32, #tpu.memory_space<vmem>>, vector<8x128xf32>,
    return
  }
}

</mosaic_0001>

<llo_original>
// kernel: tpu_custom_call.1
$region0: #{tpu_custom_call.1}
  #allocation0 [shape = 'u32[]', space=smem, size = 0x4, offset = 0x4, fixed_abs, tag = 'smem constant byte address 0x4 - core index']
  #allocation1 [shape = 'u32[72,128]{1,0:T(1,128)}', space=vmem, size = 0x9000, scoped, tag = 'internal scratch']
  %s0 = inlined_call_operand.hbm [shape: f32[8,32], index: 0, kind: input, shape index: {}]
  %s1 = inlined_call_operand.hbm [shape: f32[296,128], index: 1, kind: input, shape index: {}]
  %s2 = inlined_call_operand.hbm [shape: f32[8,128], index: 2, kind: output, shape index: {}]
  %s3 = sld [smem:[#allocation0]]
  $region26: #{tpu_custom_call.1} parent=0
    _
  %s5 = ssub.s32 1, %s3
  %s6 = scalar_select 0, %s5, %s3
  $region1: #{tpu_custom_call.1} parent=0
    #allocation2 [shape = 'u8[4096]{0}', space=vmem, size = 0x1000, scoped, tag = 'input window, operand 0, single buffered']
    #allocation3 [shape = 's32[1]{0}', space=sflag, size = 0x4, scoped, tag = 'scoped memory for tpu_custom_call.1']
    #allocation4 [shape = 's32[1]{0}', space=sflag, size = 0x4, scoped, tag = 'scoped memory for tpu_custom_call.1']
    #allocation5 [shape = 'u8[151552]{0}', space=vmem, size = 0x25000, scoped, tag = 'input window, operand 1, single buffered']
    #allocation6 [shape = 's32[1]{0}', space=sflag, size = 0x4, scoped, tag = 'scoped memory for tpu_custom_call.1']
    #allocation7 [shape = 'u8[4096]{0}', space=vmem, size = 0x1000, scoped, tag = 'output window, operand 0, single buffered']
    %7 = vsyncpa [#allocation3], 0
    %8 = vsyncpa [#allocation6], 0
    %9 = vsyncpa [#allocation4], 0
    // Predicated region
    $region2: #{tpu_custom_call.1} parent=1 // pred_check
      _
    $region3: #{tpu_custom_call.1} parent=1 // pred_check_branch
      %11 = sbr.rel (0) target = $region5
    $region4: #{tpu_custom_call.1} parent=1 // pred_region
      %13 = vsyncadd [#allocation3], 0
      %s15 = sshll.u32 %s0, 4
      %s16 = int_to_ptr.hbm [resolvable:$true] %s15
      %s17 = sshll.u32 [#allocation2], 4
      %s18 = int_to_ptr.vmem [resolvable:$true] %s17
      %20 = dma.hbm_to_vmem [thread:$0]  %s16, 128, %s18, [#allocation3]
    $region5: #{tpu_custom_call.1} parent=1 // pred_fallthru
      _
    // Predicated region
    $region6: #{tpu_custom_call.1} parent=1 // pred_check
      _
    $region7: #{tpu_custom_call.1} parent=1 // pred_check_branch
      %22 = sbr.rel (0) target = $region9
    $region8: #{tpu_custom_call.1} parent=1 // pred_region
      %24 = vsyncadd [#allocation6], 0
      %s25 = sshll.u32 %s1, 4
      %s26 = int_to_ptr.hbm [resolvable:$true] %s25
      %s27 = sshll.u32 [#allocation5], 4
      %s28 = int_to_ptr.vmem [resolvable:$true] %s27
      %33 = dma.hbm_to_vmem [thread:$0]  %s26, 4736, %s28, [#allocation6], 128, 128, 8
    $region9: #{tpu_custom_call.1} parent=1 // pred_fallthru
      _
    // Predicated region
    $region10: #{tpu_custom_call.1} parent=1 // pred_check
      _
    $region11: #{tpu_custom_call.1} parent=1 // pred_check_branch
      %35 = sbr.rel (0) target = $region13
    $region12: #{tpu_custom_call.1} parent=1 // pred_region
      %37 = dma.done [#allocation3], 128
    $region13: #{tpu_custom_call.1} parent=1 // pred_fallthru
      _
    // Predicated region
    $region14: #{tpu_custom_call.1} parent=1 // pred_check
      _
    $region15: #{tpu_custom_call.1} parent=1 // pred_check_branch
      %39 = sbr.rel (0) target = $region17
    $region16: #{tpu_custom_call.1} parent=1 // pred_region
      %41 = dma.done [#allocation6], 4736
    $region17: #{tpu_custom_call.1} parent=1 // pred_fallthru
      _
    %v42 = vld [vmem:[#allocation2] sm:$0xff]
    %v43 = vld [vmem:[#allocation5] sm:$0xff]
    %v44 = vld [vmem:[#allocation5 + $0x8] sm:$0xff]
    %v45 = vld [vmem:[#allocation5 + $0x10] sm:$0xff]
    %v46 = vld [vmem:[#allocation5 + $0x18] sm:$0xff]
    %v47 = vld [vmem:[#allocation5 + $0x120] sm:$0x1]
    %v48 = vperm.slane %v47, 0
    %vm49 = vcmask 261120
    %v51 = vsel %vm49, %v42, 0
    %53 = vmatpush.msra.mxu0 0.0
    %54 = vmatpush.msra.mxu0 0.0
    %55 = vmatpush.msra.mxu0 0.0
    %56 = vmatpush.msra.mxu0 0.0
    %57 = vmatpush.msra.mxu0 0.0
    %58 = vmatpush.msra.mxu0 0.0
    %59 = vmatpush.msra.mxu0 0.0
    %60 = vmatpush.msra.mxu0 0.0
    %61 = vmatpush.msra.mxu0 0.0
    %62 = vmatpush.msra.mxu0 0.0
    %63 = vmatpush.msra.mxu0 0.0
    %64 = vmatpush.msra.mxu0 0.0
    %65 = vmatpush.msra.mxu0 %v46
    %66 = vmatpush.msra.mxu0 %v45
    %67 = vmatpush.msra.mxu0 %v44
    %68 = vmatpush.msra.mxu0 %v43
    %69 = vmatmul.f32.gmra.mxu0 %v51
    %v70 = vpop.f32.mrf.mxu0
    %v71 = vadd.f32 %v48, %v70
    %72 = vdwg.mxu0
    %v73 = vmax.f32 %v71, 0.0
    %v74 = vld [vmem:[#allocation5 + $0x20] sm:$0xff]
    %v75 = vld [vmem:[#allocation5 + $0x28] sm:$0xff]
    %v76 = vld [vmem:[#allocation5 + $0x30] sm:$0xff]
    %v77 = vld [vmem:[#allocation5 + $0x38] sm:$0xff]
    %v78 = vld [vmem:[#allocation5 + $0x40] sm:$0xff]
    %v79 = vld [vmem:[#allocation5 + $0x48] sm:$0xff]
    %v80 = vld [vmem:[#allocation5 + $0x50] sm:$0xff]
    %v81 = vld [vmem:[#allocation5 + $0x58] sm:$0xff]
    %v82 = vld [vmem:[#allocation5 + $0x60] sm:$0xff]
    %v83 = vld [vmem:[#allocation5 + $0x68] sm:$0xff]
    %v84 = vld [vmem:[#allocation5 + $0x70] sm:$0xff]
    %v85 = vld [vmem:[#allocation5 + $0x78] sm:$0xff]
    %v86 = vld [vmem:[#allocation5 + $0x80] sm:$0xff]
    %v87 = vld [vmem:[#allocation5 + $0x88] sm:$0xff]
    %v88 = vld [vmem:[#allocation5 + $0x90] sm:$0xff]
    %v89 = vld [vmem:[#allocation5 + $0x98] sm:$0xff]
    %v90 = vld [vmem:[#allocation5 + $0x121] sm:$0x1]
    %v91 = vperm.slane %v90, 0
    %92 = vmatpush.msra.mxu0 %v89
    %93 = vmatpush.msra.mxu0 %v88
    %94 = vmatpush.msra.mxu0 %v87
    %95 = vmatpush.msra.mxu0 %v86
    %96 = vmatpush.msra.mxu0 %v85
    %97 = vmatpush.msra.mxu0 %v84
    %98 = vmatpush.msra.mxu0 %v83
    %99 = vmatpush.msra.mxu0 %v82
    %100 = vmatpush.msra.mxu0 %v81
    %101 = vmatpush.msra.mxu0 %v80
    %102 = vmatpush.msra.mxu0 %v79
    %103 = vmatpush.msra.mxu0 %v78
    %104 = vmatpush.msra.mxu0 %v77
    %105 = vmatpush.msra.mxu0 %v76
    %106 = vmatpush.msra.mxu0 %v75
    %107 = vmatpush.msra.mxu0 %v74
    %108 = vmatmul.f32.gmra.mxu0 %v73
    %v109 = vpop.f32.mrf.mxu0
    %v110 = vadd.f32 %v91, %v109
    %111 = vdwg.mxu0
    %v112 = vmax.f32 %v110, 0.0
    %v113 = vld [vmem:[#allocation5 + $0xa0] sm:$0xff]
    %v114 = vld [vmem:[#allocation5 + $0xa8] sm:$0xff]
    %v115 = vld [vmem:[#allocation5 + $0xb0] sm:$0xff]
    %v116 = vld [vmem:[#allocation5 + $0xb8] sm:$0xff]
    %v117 = vld [vmem:[#allocation5 + $0xc0] sm:$0xff]
    %v118 = vld [vmem:[#allocation5 + $0xc8] sm:$0xff]
    %v119 = vld [vmem:[#allocation5 + $0xd0] sm:$0xff]
    %v120 = vld [vmem:[#allocation5 + $0xd8] sm:$0xff]
    %v121 = vld [vmem:[#allocation5 + $0xe0] sm:$0xff]
    %v122 = vld [vmem:[#allocation5 + $0xe8] sm:$0xff]
    %v123 = vld [vmem:[#allocation5 + $0xf0] sm:$0xff]
    %v124 = vld [vmem:[#allocation5 + $0xf8] sm:$0xff]
    %v125 = vld [vmem:[#allocation5 + $0x100] sm:$0xff]
    %v126 = vld [vmem:[#allocation5 + $0x108] sm:$0xff]
    %v127 = vld [vmem:[#allocation5 + $0x110] sm:$0xff]
    %v128 = vld [vmem:[#allocation5 + $0x118] sm:$0xff]
    %v129 = vld [vmem:[#allocation5 + $0x122] sm:$0x1]
    %v130 = vperm.slane %v129, 0
    %131 = vmatpush.msra.mxu0 %v128
    %132 = vmatpush.msra.mxu0 %v127
    %133 = vmatpush.msra.mxu0 %v126
    %134 = vmatpush.msra.mxu0 %v125
    %135 = vmatpush.msra.mxu0 %v124
    %136 = vmatpush.msra.mxu0 %v123
    %137 = vmatpush.msra.mxu0 %v122
    %138 = vmatpush.msra.mxu0 %v121
    %139 = vmatpush.msra.mxu0 %v120
    %140 = vmatpush.msra.mxu0 %v119
    %141 = vmatpush.msra.mxu0 %v118
    %142 = vmatpush.msra.mxu0 %v117
    %143 = vmatpush.msra.mxu0 %v116
    %144 = vmatpush.msra.mxu0 %v115
    %145 = vmatpush.msra.mxu0 %v114
    %146 = vmatpush.msra.mxu0 %v113
    %147 = vmatmul.f32.gmra.mxu0 %v112
    %v148 = vpop.f32.mrf.mxu0
    %v149 = vadd.f32 %v130, %v148
    %150 = vdwg.mxu0
    %v151 = vlaneseq
    %v152 = vand.u32 %v151, 127
    %vm153 = vcmp.lt.s32.totalorder %v152, 7
    %vm154 = vcmp.eq.s32.totalorder %v152, 7
    %v155 = vmul.f32 %v149, 1e-06
    %v156 = vmul.f32 %v155, 1.442695
    %v157 = vpow.pop %v156
    %v158 = vsel %vm153, %v157, 0.0
    %159 = vadd.xlane.f32.xlu0 %v158
    %v160 = vpop.xlane.xlu0 %159
    %v161 = vrot.slane %v160, 4
    %v162 = vadd.f32 %v160, %v161
    %v163 = vrot.slane %v162, 2
    %v164 = vadd.f32 %v162, %v163
    %v165 = vrot.slane %v164, 1
    %v166 = vadd.f32 %v164, %v165
    %s167 = vtos %v166
    %v168 = vstv %s167
    %v169 = vrcp.pop %v168
    %v170 = vmul.f32 %v168, %v169
    %v171 = vsub.f32 1.0, %v170
    %v172 = vmul.f32 %v169, %v171
    %v173 = vadd.f32 %v169, %v172
    %vm174 = vweird.f32 %v168
    %vm175 = vweird.f32 %v169
    %vm176 = vmor %vm174, %vm175
    %v177 = vsel %vm176, %v169, %v173
    %v178 = vand.u32 2147483647, %v168
    %vm179 = vcmp.eq.f32.partialorder %v178, 8.507059e+37
    %v180 = vand.u32 %v168, 2147483648
    %v181 = vor.u32 1.1754944e-38, %v180
    %v182 = vsel %vm179, %v181, %v177
    %v183 = vmul.f32 %v157, %v182
    %v184 = vmax.f32 %v149, 0.0
    %v185 = vsel %vm154, %v184, 0.0
    %v186 = vsel %vm153, %v183, %v185
    %187 = vst [vmem:[#allocation7] sm:$0xff] %v186
    // Predicated region
    $region18: #{tpu_custom_call.1} parent=1 // pred_check
      _
    $region19: #{tpu_custom_call.1} parent=1 // pred_check_branch
      %189 = sbr.rel (0) target = $region21
    $region20: #{tpu_custom_call.1} parent=1 // pred_region
      %191 = vsyncadd [#allocation4], 0
      %s193 = sshll.u32 [#allocation7], 4
      %s194 = int_to_ptr.vmem [resolvable:$true] %s193
      %s195 = sshll.u32 %s2, 4
      %s196 = int_to_ptr.hbm [resolvable:$true] %s195
      %198 = dma.vmem_to_hbm [thread:$0]  %s194, 128, %s196, [#allocation4]
    $region21: #{tpu_custom_call.1} parent=1 // pred_fallthru
      _
    // Predicated region
    $region22: #{tpu_custom_call.1} parent=1 // pred_check
      _
    $region23: #{tpu_custom_call.1} parent=1 // pred_check_branch
      %200 = sbr.rel (0) target = $region25
    $region24: #{tpu_custom_call.1} parent=1 // pred_region
      %202 = dma.done [#allocation4], 128
    $region25: #{tpu_custom_call.1} parent=1 // pred_fallthru
      _
    %203 = vsyncpa [#allocation3], 1
    %204 = vsyncpa [#allocation6], 1
    %205 = vsyncpa [#allocation4], 1

</llo_original>
